<compile_context>
chip_gen: v7x
topology: tpu7x:2x2x1
jax: 0.10.0
libtpu: 0.0.40
codegen_flags: <defaults>
</compile_context>

<pallas_src>
import jax
import jax.numpy as jnp
from jax.experimental import pallas as pl
from jax.experimental.pallas import tpu as pltpu


def lstm_disc_kernel(xg_ref, h0_ref, c0_ref, whh_ref, wmlp_ref, bmlp_ref,
                     out_ref):
    T = xg_ref.shape[0]
    Bb, G = h0_ref.shape          # G = 4*H; gate lane order is [o | i | f | g]
    H = G // 4

    whh = whh_ref[...]            # (G, G) bf16; rows [0:H) = permuted w_hh^T, rest 0
    h = h0_ref[...]               # (Bb, G) f32; live state in lanes [0, H)
    c = c0_ref[...]               # (Bb, G) f32; live state in lanes [0, H)

    # Lane mask for the tanh gate (g lives in segment 3, lanes [3H, 4H)).
    g_mask = jax.lax.broadcasted_iota(jnp.int32, (Bb, G), 1) >= 3 * H

    def cell(xg_t, h, c):
        # xg_t already holds x_t * W_ih + (b_ih + b_hh); add recurrent term.
        gates = xg_t + jnp.dot(h.astype(jnp.bfloat16), whh,
                               preferred_element_type=jnp.float32)
        # One EUP pass over the gates: tanh(x) = 2*sigmoid(2x) - 1 on the g
        # segment, plain sigmoid elsewhere (the pre/post scaling is VPU work).
        s = jax.nn.sigmoid(jnp.where(g_mask, 2.0 * gates, gates))
        act = jnp.where(g_mask, 2.0 * s - 1.0, s)      # [o | i | f | g]
        r2 = pltpu.roll(act, 2 * H, axis=1)            # [f | g | o | i]
        prod = act * r2                                # [o*f | i*g | f*o | g*i]
        c_new = r2 * c + pltpu.roll(prod, H, axis=1)   # seg0: f*c + i*g
        h_new = act * jnp.tanh(c_new)                  # seg0: o*tanh(c_new)
        return h_new, c_new

    if T <= 16:
        # Short static trip count: full unroll keeps the LLO window visible.
        for t in range(T):
            h, c = cell(xg_ref[t], h, c)
    else:
        def body(t, carry):
            hh, cc = carry
            return cell(xg_ref[t], hh, cc)
        h, c = jax.lax.fori_loop(0, T, body, (h, c), unroll=2)

    # MLP head: Linear(H, 1) + Sigmoid as VPU multiply + lane reduce
    # (wmlp is zero-padded to G lanes, so inert lanes of h never contribute).
    logit = jnp.sum(h * wmlp_ref[...], axis=1, keepdims=True) + bmlp_ref[0]
    prob = jax.nn.sigmoid(logit)                        # (Bb, 1)
    # Lane-dense (128-wide) unmasked store; wrapper slices column 0.
    out_ref[...] = jnp.broadcast_to(prob, out_ref.shape).astype(out_ref.dtype)


def _permute_gates(a, H):
    """Reorder torch LSTMCell gate axis [i|f|g|o] -> kernel lane order [o|i|f|g]."""
    return jnp.concatenate(
        [a[..., 3 * H:4 * H], a[..., 0:H], a[..., H:2 * H], a[..., 2 * H:3 * H]],
        axis=-1)


def _round_up(a, m):
    return ((a + m - 1) // m) * m


def lstm_discriminator(x, h0, c0, w_ih, w_hh, b_ih, b_hh, w_mlp, b_mlp,
                       *, block_b=64):
    """x: (B, T); h0, c0: (B, H); torch LSTMCell / Linear weights. Returns (B, 1)."""
    B, T = x.shape
    H = h0.shape[1]
    G = 4 * H
    f32 = jnp.float32

    # ---- one-time parameter preprocessing (outside the kernel) ----
    wih_row = _permute_gates(w_ih.T.astype(f32), H)                        # (1, G)
    b_row = _permute_gates((b_ih + b_hh).reshape(1, G).astype(f32), H)     # (1, G)
    whh_big = jnp.zeros((G, G), f32).at[:H, :].set(
        _permute_gates(w_hh.T.astype(f32), H)).astype(jnp.bfloat16)        # (G, G)
    wmlp_pad = jnp.zeros((1, G), f32).at[:, :H].set(w_mlp.astype(f32))     # (1, G)
    bmlp = b_mlp.reshape(1).astype(f32)                                    # (1,) SMEM

    # Hoisted input contribution, computed once by XLA and streamed to the
    # kernel as a (T, B, G) input (leading-axis reads in the recurrence).
    xg = (x.astype(f32)[:, :, None] * wih_row.reshape(1, 1, G)
          + b_row.reshape(1, 1, G))                                        # (B, T, G)
    xg = jnp.transpose(xg, (1, 0, 2))                                      # (T, B, G)

    # h/c live in lane segment 0 of a (B, 4H) buffer; the other lane segments
    # are inert (W_hh zero rows / wmlp zero lanes never read them).
    h0_buf = jnp.zeros((B, G), f32).at[:, :H].set(h0.astype(f32))
    c0_buf = jnp.zeros((B, G), f32).at[:, :H].set(c0.astype(f32))

    # ---- batch tiling ----
    # Small blocks keep the serial recurrence inside the 64-vreg file; capping
    # at ~B/2 guarantees >= 2 grid steps when B allows, so the "parallel"
    # axis actually shards across both TensorCores on v7x.
    bb = max(8, min(block_b, _round_up(-(-B // 2), 8)))
    # Keep the double-buffered streamed-xg tile v7x-safe (64 MiB physical).
    while bb > 8 and 2 * T * bb * G * 4 > (24 << 20):
        bb = max(8, bb // 2)
    # TODO(synk): for very long T, add an inner "arbitrary" T grid axis
    # carrying (h, c) in VMEM scratch instead of loading all timesteps/block.
    nb = pl.cdiv(B, bb)
    Bp = nb * bb
    if Bp != B:
        xg = jnp.pad(xg, ((0, 0), (0, Bp - B), (0, 0)))
        h0_buf = jnp.pad(h0_buf, ((0, Bp - B), (0, 0)))
        c0_buf = jnp.pad(c0_buf, ((0, Bp - B), (0, 0)))

    # Explicit VMEM budget: double-buffered inputs + output, plus headroom.
    in_bytes = (T * bb * G * 4          # xg tile
                + 2 * bb * G * 4        # h0, c0
                + G * G * 2             # whh (bf16)
                + G * 4)                # wmlp
    out_bytes = bb * 128 * 4
    vmem_limit = max(2 * (in_bytes + out_bytes) + (4 << 20), 16 << 20)

    out = pl.pallas_call(
        lstm_disc_kernel,
        out_shape=jax.ShapeDtypeStruct((Bp, 128), f32),
        grid=(nb,),
        in_specs=[
            pl.BlockSpec((T, bb, G), lambda i: (0, i, 0)),       # xg stream
            pl.BlockSpec((bb, G), lambda i: (i, 0)),             # h0 buffer
            pl.BlockSpec((bb, G), lambda i: (i, 0)),             # c0 buffer
            pl.BlockSpec((G, G), lambda i: (0, 0)),              # w_hh (padded, bf16)
            pl.BlockSpec((1, G), lambda i: (0, 0)),              # mlp weight row
            pl.BlockSpec(memory_space=pltpu.MemorySpace.SMEM),   # mlp bias scalar
        ],
        out_specs=pl.BlockSpec((bb, 128), lambda i: (i, 0)),
        compiler_params=pltpu.CompilerParams(
            dimension_semantics=("parallel",),
            vmem_limit_bytes=vmem_limit),
    )(xg, h0_buf, c0_buf, whh_big, wmlp_pad, bmlp)
    return out[:B, 0:1]


def _reference(x, h0, c0, w_ih, w_hh, b_ih, b_hh, w_mlp, b_mlp):
    """Pure-JAX f32 reference matching torch.nn.LSTMCell semantics."""
    H = h0.shape[1]
    hi = jax.lax.Precision.HIGHEST
    h, c = h0, c0
    for t in range(x.shape[1]):
        x_t = x[:, t:t + 1]
        gates = (jnp.dot(x_t, w_ih.T, precision=hi) + b_ih
                 + jnp.dot(h, w_hh.T, precision=hi) + b_hh)
        i_g = jax.nn.sigmoid(gates[:, 0:H])
        f_g = jax.nn.sigmoid(gates[:, H:2 * H])
        g_g = jnp.tanh(gates[:, 2 * H:3 * H])
        o_g = jax.nn.sigmoid(gates[:, 3 * H:4 * H])
        c = f_g * c + i_g * g_g
        h = o_g * jnp.tanh(c)
    return jax.nn.sigmoid(jnp.dot(h, w_mlp.T, precision=hi) + b_mlp)


if __name__ == "__main__":
    B, T, H = 2, 8, 32  # batch=2, seq=8, lstm_dim=32
    key = jax.random.PRNGKey(0)
    kx, kh, kc, k1, k2, k3, k4, k5, k6 = jax.random.split(key, 9)

    x = jax.random.normal(kx, (B, T), dtype=jnp.float32)
    # Random initial states, mirroring torch.randn in the module's forward.
    h0 = jax.random.normal(kh, (B, H), dtype=jnp.float32)
    c0 = jax.random.normal(kc, (B, H), dtype=jnp.float32)

    # Deterministic parameter init (PyTorch-style uniform(-1/sqrt(H), 1/sqrt(H))).
    bound = 1.0 / jnp.sqrt(jnp.float32(H))
    w_ih = jax.random.uniform(k1, (4 * H, 1), jnp.float32, -bound, bound)
    w_hh = jax.random.uniform(k2, (4 * H, H), jnp.float32, -bound, bound)
    b_ih = jax.random.uniform(k3, (4 * H,), jnp.float32, -bound, bound)
    b_hh = jax.random.uniform(k4, (4 * H,), jnp.float32, -bound, bound)
    w_mlp = jax.random.uniform(k5, (1, H), jnp.float32, -bound, bound)
    b_mlp = jax.random.uniform(k6, (1,), jnp.float32, -bound, bound)

    out = lstm_discriminator(x, h0, c0, w_ih, w_hh, b_ih, b_hh, w_mlp, b_mlp)
    out = jax.block_until_ready(out)

    ref = _reference(x, h0, c0, w_ih, w_hh, b_ih, b_hh, w_mlp, b_mlp)
    assert out.shape == (B, 1)
    # Tolerance relaxed (1e-2) because the recurrence matmul uses bf16 inputs
    # with f32 accumulation; activations are bounded so error stays ~1e-3.
    # (Keep W_hh in f32 instead if exactness over long T matters.)
    assert jnp.allclose(out, ref, atol=1e-2, rtol=1e-2), (out, ref)
    print("KERNEL_OK")
</pallas_src>

<mosaic_0001>
module attributes {stable_mosaic.version = 11 : i64} {
  func.func @lstm_disc_kernel(%arg0: i32, %arg1: memref<8x8x128xf32, #tpu.memory_space<vmem>>, %arg2: memref<8x128xf32, #tpu.memory_space<vmem>>, %arg3: memref<8x128xf32, #tpu.memory_space<vmem>>, %arg4: memref<128x128xbf16, #tpu.memory_space<vmem>>, %arg5: memref<1x128xf32, #tpu.memory_space<vmem>>, %arg6: memref<1xf32, #tpu.memory_space<smem>>, %arg7: memref<8x128xf32, #tpu.memory_space<vmem>>) attributes {dimension_semantics = [#tpu.dimension_semantics<parallel>], iteration_bounds = array<i64: 1>, scalar_prefetch = 0 : i64, scratch_operands = 0 : i64, tpu.core_type = #tpu.core_type<tc>, window_params = [{transform_indices = @transform_0, window_bounds = array<i64: 8, 8, 128>}, {transform_indices = @transform_1, window_bounds = array<i64: 8, 128>}, {transform_indices = @transform_2, window_bounds = array<i64: 8, 128>}, {pipeline_mode = #tpu.pipeline_mode<synchronous>, transform_indices = @transform_3, window_bounds = array<i64: 128, 128>}, {pipeline_mode = #tpu.pipeline_mode<synchronous>, transform_indices = @transform_4, window_bounds = array<i64: 1, 128>}, {transform_indices = @transform_5, window_bounds = array<i64: 1>}, {transform_indices = @transform_6, window_bounds = array<i64: 8, 128>}]} {
    %c0 = arith.constant 0 : index
    %c0_0 = arith.constant 0 : index
    %0 = vector.load %arg4[%c0, %c0_0] : memref<128x128xbf16, #tpu.memory_space<vmem>>, vector<128x128xbf16>
    %c0_1 = arith.constant 0 : index
    %c0_2 = arith.constant 0 : index
    %1 = vector.load %arg2[%c0_1, %c0_2] : memref<8x128xf32, #tpu.memory_space<vmem>>, vector<8x128xf32>
    %c0_3 = arith.constant 0 : index
    %c0_4 = arith.constant 0 : index
    %2 = vector.load %arg3[%c0_3, %c0_4] : memref<8x128xf32, #tpu.memory_space<vmem>>, vector<8x128xf32>
    %3 = tpu.iota {dimensions = array<i32: 1>} : vector<8x128xi32>
    %c96_i32 = arith.constant 96 : i32
    %4 = vector.broadcast %c96_i32 : i32 to vector<8x128xi32>
    %5 = arith.cmpi sge, %3, %4 : vector<8x128xi32>
    %c0_5 = arith.constant 0 : index
    %c0_6 = arith.constant 0 : index
    %c0_7 = arith.constant 0 : index
    %6 = vector.load %arg1[%c0_5, %c0_6, %c0_7] : memref<8x8x128xf32, #tpu.memory_space<vmem>>, vector<1x8x128xf32>
    %7 = vector.shape_cast %6 : vector<1x8x128xf32> to vector<8x128xf32>
    %8 = arith.truncf %1 : vector<8x128xf32> to vector<8x128xbf16>
    %cst = arith.constant dense<0.000000e+00> : vector<8x128xf32>
    %9 = tpu.matmul %8, %0, %cst {dimension_numbers = #tpu.dot_dimension_numbers<[1], [0], [0], [1], [0, 0, 1, 1], [], []>} : vector<8x128xbf16>, vector<128x128xbf16>, vector<8x128xf32> -> vector<8x128xf32>
    %10 = arith.addf %7, %9 : vector<8x128xf32>
    %cst_8 = arith.constant 2.000000e+00 : f32
    %11 = vector.broadcast %cst_8 : f32 to vector<8x128xf32>
    %12 = arith.mulf %11, %10 : vector<8x128xf32>
    %13 = arith.select %5, %12, %10 : vector<8x128xi1>, vector<8x128xf32>
    %14 = arith.negf %13 : vector<8x128xf32>
    %15 = math.exp %14 : vector<8x128xf32>
    %cst_9 = arith.constant 1.000000e+00 : f32
    %16 = vector.broadcast %cst_9 : f32 to vector<8x128xf32>
    %17 = arith.addf %16, %15 : vector<8x128xf32>
    %18 = arith.divf %16, %17 : vector<8x128xf32>
    %cst_10 = arith.constant 2.000000e+00 : f32
    %19 = vector.broadcast %cst_10 : f32 to vector<8x128xf32>
    %20 = arith.mulf %19, %18 : vector<8x128xf32>
    %cst_11 = arith.constant 1.000000e+00 : f32
    %21 = vector.broadcast %cst_11 : f32 to vector<8x128xf32>
    %22 = arith.subf %20, %21 : vector<8x128xf32>
    %23 = arith.select %5, %22, %18 : vector<8x128xi1>, vector<8x128xf32>
    %c64_i32 = arith.constant 64 : i32
    %24 = tpu.dynamic_rotate %23 by %c64_i32 dim 1 : vector<8x128xf32>, i32 -> vector<8x128xf32>
    %25 = arith.mulf %23, %24 : vector<8x128xf32>
    %26 = arith.mulf %24, %2 : vector<8x128xf32>
    %c32_i32 = arith.constant 32 : i32
    %27 = tpu.dynamic_rotate %25 by %c32_i32 dim 1 : vector<8x128xf32>, i32 -> vector<8x128xf32>
    %28 = arith.addf %26, %27 : vector<8x128xf32>
    %29 = math.tanh %28 : vector<8x128xf32>
    %30 = arith.mulf %23, %29 : vector<8x128xf32>
    %c1 = arith.constant 1 : index
    %c0_12 = arith.constant 0 : index
    %c0_13 = arith.constant 0 : index
    %31 = vector.load %arg1[%c1, %c0_12, %c0_13] : memref<8x8x128xf32, #tpu.memory_space<vmem>>, vector<1x8x128xf32>
    %32 = vector.shape_cast %31 : vector<1x8x128xf32> to vector<8x128xf32>
    %33 = arith.truncf %30 : vector<8x128xf32> to vector<8x128xbf16>
    %cst_14 = arith.constant dense<0.000000e+00> : vector<8x128xf32>
    %34 = tpu.matmul %33, %0, %cst_14 {dimension_numbers = #tpu.dot_dimension_numbers<[1], [0], [0], [1], [0, 0, 1, 1], [], []>} : vector<8x128xbf16>, vector<128x128xbf16>, vector<8x128xf32> -> vector<8x128xf32>
    %35 = arith.addf %32, %34 : vector<8x128xf32>
    %cst_15 = arith.constant 2.000000e+00 : f32
    %36 = vector.broadcast %cst_15 : f32 to vector<8x128xf32>
    %37 = arith.mulf %36, %35 : vector<8x128xf32>
    %38 = arith.select %5, %37, %35 : vector<8x128xi1>, vector<8x128xf32>
    %39 = arith.negf %38 : vector<8x128xf32>
    %40 = math.exp %39 : vector<8x128xf32>
    %cst_16 = arith.constant 1.000000e+00 : f32
    %41 = vector.broadcast %cst_16 : f32 to vector<8x128xf32>
    %42 = arith.addf %41, %40 : vector<8x128xf32>
    %43 = arith.divf %41, %42 : vector<8x128xf32>
    %cst_17 = arith.constant 2.000000e+00 : f32
    %44 = vector.broadcast %cst_17 : f32 to vector<8x128xf32>
    %45 = arith.mulf %44, %43 : vector<8x128xf32>
    %cst_18 = arith.constant 1.000000e+00 : f32
    %46 = vector.broadcast %cst_18 : f32 to vector<8x128xf32>
    %47 = arith.subf %45, %46 : vector<8x128xf32>
    %48 = arith.select %5, %47, %43 : vector<8x128xi1>, vector<8x128xf32>
    %c64_i32_19 = arith.constant 64 : i32
    %49 = tpu.dynamic_rotate %48 by %c64_i32_19 dim 1 : vector<8x128xf32>, i32 -> vector<8x128xf32>
    %50 = arith.mulf %48, %49 : vector<8x128xf32>
    %51 = arith.mulf %49, %28 : vector<8x128xf32>
    %c32_i32_20 = arith.constant 32 : i32
    %52 = tpu.dynamic_rotate %50 by %c32_i32_20 dim 1 : vector<8x128xf32>, i32 -> vector<8x128xf32>
    %53 = arith.addf %51, %52 : vector<8x128xf32>
    %54 = math.tanh %53 : vector<8x128xf32>
    %55 = arith.mulf %48, %54 : vector<8x128xf32>
    %c2 = arith.constant 2 : index
    %c0_21 = arith.constant 0 : index
    %c0_22 = arith.constant 0 : index
    %56 = vector.load %arg1[%c2, %c0_21, %c0_22] : memref<8x8x128xf32, #tpu.memory_space<vmem>>, vector<1x8x128xf32>
    %57 = vector.shape_cast %56 : vector<1x8x128xf32> to vector<8x128xf32>
    %58 = arith.truncf %55 : vector<8x128xf32> to vector<8x128xbf16>
    %cst_23 = arith.constant dense<0.000000e+00> : vector<8x128xf32>
    %59 = tpu.matmul %58, %0, %cst_23 {dimension_numbers = #tpu.dot_dimension_numbers<[1], [0], [0], [1], [0, 0, 1, 1], [], []>} : vector<8x128xbf16>, vector<128x128xbf16>, vector<8x128xf32> -> vector<8x128xf32>
    %60 = arith.addf %57, %59 : vector<8x128xf32>
    %cst_24 = arith.constant 2.000000e+00 : f32
    %61 = vector.broadcast %cst_24 : f32 to vector<8x128xf32>
    %62 = arith.mulf %61, %60 : vector<8x128xf32>
    %63 = arith.select %5, %62, %60 : vector<8x128xi1>, vector<8x128xf32>
    %64 = arith.negf %63 : vector<8x128xf32>
    %65 = math.exp %64 : vector<8x128xf32>
    %cst_25 = arith.constant 1.000000e+00 : f32
    %66 = vector.broadcast %cst_25 : f32 to vector<8x128xf32>
    %67 = arith.addf %66, %65 : vector<8x128xf32>
    %68 = arith.divf %66, %67 : vector<8x128xf32>
    %cst_26 = arith.constant 2.000000e+00 : f32
    %69 = vector.broadcast %cst_26 : f32 to vector<8x128xf32>
    %70 = arith.mulf %69, %68 : vector<8x128xf32>
    %cst_27 = arith.constant 1.000000e+00 : f32
    %71 = vector.broadcast %cst_27 : f32 to vector<8x128xf32>
    %72 = arith.subf %70, %71 : vector<8x128xf32>
    %73 = arith.select %5, %72, %68 : vector<8x128xi1>, vector<8x128xf32>
    %c64_i32_28 = arith.constant 64 : i32
    %74 = tpu.dynamic_rotate %73 by %c64_i32_28 dim 1 : vector<8x128xf32>, i32 -> vector<8x128xf32>
    %75 = arith.mulf %73, %74 : vector<8x128xf32>
    %76 = arith.mulf %74, %53 : vector<8x128xf32>
    %c32_i32_29 = arith.constant 32 : i32
    %77 = tpu.dynamic_rotate %75 by %c32_i32_29 dim 1 : vector<8x128xf32>, i32 -> vector<8x128xf32>
    %78 = arith.addf %76, %77 : vector<8x128xf32>
    %79 = math.tanh %78 : vector<8x128xf32>
    %80 = arith.mulf %73, %79 : vector<8x128xf32>
    %c3 = arith.constant 3 : index
    %c0_30 = arith.constant 0 : index
    %c0_31 = arith.constant 0 : index
    %81 = vector.load %arg1[%c3, %c0_30, %c0_31] : memref<8x8x128xf32, #tpu.memory_space<vmem>>, vector<1x8x128xf32>
    %82 = vector.shape_cast %81 : vector<1x8x128xf32> to vector<8x128xf32>
    %83 = arith.truncf %80 : vector<8x128xf32> to vector<8x128xbf16>
    %cst_32 = arith.constant dense<0.000000e+00> : vector<8x128xf32>
    %84 = tpu.matmul %83, %0, %cst_32 {dimension_numbers = #tpu.dot_dimension_numbers<[1], [0], [0], [1], [0, 0, 1, 1], [], []>} : vector<8x128xbf16>, vector<128x128xbf16>, vector<8x128xf32> -> vector<8x128xf32>
    %85 = arith.addf %82, %84 : vector<8x128xf32>
    %cst_33 = arith.constant 2.000000e+00 : f32
    %86 = vector.broadcast %cst_33 : f32 to vector<8x128xf32>
    %87 = arith.mulf %86, %85 : vector<8x128xf32>
    %88 = arith.select %5, %87, %85 : vector<8x128xi1>, vector<8x128xf32>
    %89 = arith.negf %88 : vector<8x128xf32>
    %90 = math.exp %89 : vector<8x128xf32>
    %cst_34 = arith.constant 1.000000e+00 : f32
    %91 = vector.broadcast %cst_34 : f32 to vector<8x128xf32>
    %92 = arith.addf %91, %90 : vector<8x128xf32>
    %93 = arith.divf %91, %92 : vector<8x128xf32>
    %cst_35 = arith.constant 2.000000e+00 : f32
    %94 = vector.broadcast %cst_35 : f32 to vector<8x128xf32>
    %95 = arith.mulf %94, %93 : vector<8x128xf32>
    %cst_36 = arith.constant 1.000000e+00 : f32
    %96 = vector.broadcast %cst_36 : f32 to vector<8x128xf32>
    %97 = arith.subf %95, %96 : vector<8x128xf32>
    %98 = arith.select %5, %97, %93 : vector<8x128xi1>, vector<8x128xf32>
    %c64_i32_37 = arith.constant 64 : i32
    %99 = tpu.dynamic_rotate %98 by %c64_i32_37 dim 1 : vector<8x128xf32>, i32 -> vector<8x128xf32>
    %100 = arith.mulf %98, %99 : vector<8x128xf32>
    %101 = arith.mulf %99, %78 : vector<8x128xf32>
    %c32_i32_38 = arith.constant 32 : i32
    %102 = tpu.dynamic_rotate %100 by %c32_i32_38 dim 1 : vector<8x128xf32>, i32 -> vector<8x128xf32>
    %103 = arith.addf %101, %102 : vector<8x128xf32>
    %104 = math.tanh %103 : vector<8x128xf32>
    %105 = arith.mulf %98, %104 : vector<8x128xf32>
    %c4 = arith.constant 4 : index
    %c0_39 = arith.constant 0 : index
    %c0_40 = arith.constant 0 : index
    %106 = vector.load %arg1[%c4, %c0_39, %c0_40] : memref<8x8x128xf32, #tpu.memory_space<vmem>>, vector<1x8x128xf32>
    %107 = vector.shape_cast %106 : vector<1x8x128xf32> to vector<8x128xf32>
    %108 = arith.truncf %105 : vector<8x128xf32> to vector<8x128xbf16>
    %cst_41 = arith.constant dense<0.000000e+00> : vector<8x128xf32>
    %109 = tpu.matmul %108, %0, %cst_41 {dimension_numbers = #tpu.dot_dimension_numbers<[1], [0], [0], [1], [0, 0, 1, 1], [], []>} : vector<8x128xbf16>, vector<128x128xbf16>, vector<8x128xf32> -> vector<8x128xf32>
    %110 = arith.addf %107, %109 : vector<8x128xf32>
    %cst_42 = arith.constant 2.000000e+00 : f32
    %111 = vector.broadcast %cst_42 : f32 to vector<8x128xf32>
    %112 = arith.mulf %111, %110 : vector<8x128xf32>
    %113 = arith.select %5, %112, %110 : vector<8x128xi1>, vector<8x128xf32>
    %114 = arith.negf %113 : vector<8x128xf32>
    %115 = math.exp %114 : vector<8x128xf32>
    %cst_43 = arith.constant 1.000000e+00 : f32
    %116 = vector.broadcast %cst_43 : f32 to vector<8x128xf32>
    %117 = arith.addf %116, %115 : vector<8x128xf32>
    %118 = arith.divf %116, %117 : vector<8x128xf32>
    %cst_44 = arith.constant 2.000000e+00 : f32
    %119 = vector.broadcast %cst_44 : f32 to vector<8x128xf32>
    %120 = arith.mulf %119, %118 : vector<8x128xf32>
    %cst_45 = arith.constant 1.000000e+00 : f32
    %121 = vector.broadcast %cst_45 : f32 to vector<8x128xf32>
    %122 = arith.subf %120, %121 : vector<8x128xf32>
    %123 = arith.select %5, %122, %118 : vector<8x128xi1>, vector<8x128xf32>
    %c64_i32_46 = arith.constant 64 : i32
    %124 = tpu.dynamic_rotate %123 by %c64_i32_46 dim 1 : vector<8x128xf32>, i32 -> vector<8x128xf32>
    %125 = arith.mulf %123, %124 : vector<8x128xf32>
    %126 = arith.mulf %124, %103 : vector<8x128xf32>
    %c32_i32_47 = arith.constant 32 : i32
    %127 = tpu.dynamic_rotate %125 by %c32_i32_47 dim 1 : vector<8x128xf32>, i32 -> vector<8x128xf32>
    %128 = arith.addf %126, %127 : vector<8x128xf32>
    %129 = math.tanh %128 : vector<8x128xf32>
    %130 = arith.mulf %123, %129 : vector<8x128xf32>
    %c5 = arith.constant 5 : index
    %c0_48 = arith.constant 0 : index
    %c0_49 = arith.constant 0 : index
    %131 = vector.load %arg1[%c5, %c0_48, %c0_49] : memref<8x8x128xf32, #tpu.memory_space<vmem>>, vector<1x8x128xf32>
    %132 = vector.shape_cast %131 : vector<1x8x128xf32> to vector<8x128xf32>
    %133 = arith.truncf %130 : vector<8x128xf32> to vector<8x128xbf16>
    %cst_50 = arith.constant dense<0.000000e+00> : vector<8x128xf32>
    %134 = tpu.matmul %133, %0, %cst_50 {dimension_numbers = #tpu.dot_dimension_numbers<[1], [0], [0], [1], [0, 0, 1, 1], [], []>} : vector<8x128xbf16>, vector<128x128xbf16>, vector<8x128xf32> -> vector<8x128xf32>
    %135 = arith.addf %132, %134 : vector<8x128xf32>
    %cst_51 = arith.constant 2.000000e+00 : f32
    %136 = vector.broadcast %cst_51 : f32 to vector<8x128xf32>
    %137 = arith.mulf %136, %135 : vector<8x128xf32>
    %138 = arith.select %5, %137, %135 : vector<8x128xi1>, vector<8x128xf32>
    %139 = arith.negf %138 : vector<8x128xf32>
    %140 = math.exp %139 : vector<8x128xf32>
    %cst_52 = arith.constant 1.000000e+00 : f32
    %141 = vector.broadcast %cst_52 : f32 to vector<8x128xf32>
    %142 = arith.addf %141, %140 : vector<8x128xf32>
    %143 = arith.divf %141, %142 : vector<8x128xf32>
    %cst_53 = arith.constant 2.000000e+00 : f32
    %144 = vector.broadcast %cst_53 : f32 to vector<8x128xf32>
    %145 = arith.mulf %144, %143 : vector<8x128xf32>
    %cst_54 = arith.constant 1.000000e+00 : f32
    %146 = vector.broadcast %cst_54 : f32 to vector<8x128xf32>
    %147 = arith.subf %145, %146 : vector<8x128xf32>
    %148 = arith.select %5, %147, %143 : vector<8x128xi1>, vector<8x128xf32>
    %c64_i32_55 = arith.constant 64 : i32
    %149 = tpu.dynamic_rotate %148 by %c64_i32_55 dim 1 : vector<8x128xf32>, i32 -> vector<8x128xf32>
    %150 = arith.mulf %148, %149 : vector<8x128xf32>
    %151 = arith.mulf %149, %128 : vector<8x128xf32>
    %c32_i32_56 = arith.constant 32 : i32
    %152 = tpu.dynamic_rotate %150 by %c32_i32_56 dim 1 : vector<8x128xf32>, i32 -> vector<8x128xf32>
    %153 = arith.addf %151, %152 : vector<8x128xf32>
    %154 = math.tanh %153 : vector<8x128xf32>
    %155 = arith.mulf %148, %154 : vector<8x128xf32>
    %c6 = arith.constant 6 : index
    %c0_57 = arith.constant 0 : index
    %c0_58 = arith.constant 0 : index
    %156 = vector.load %arg1[%c6, %c0_57, %c0_58] : memref<8x8x128xf32, #tpu.memory_space<vmem>>, vector<1x8x128xf32>
    %157 = vector.shape_cast %156 : vector<1x8x128xf32> to vector<8x128xf32>
    %158 = arith.truncf %155 : vector<8x128xf32> to vector<8x128xbf16>
    %cst_59 = arith.constant dense<0.000000e+00> : vector<8x128xf32>
    %159 = tpu.matmul %158, %0, %cst_59 {dimension_numbers = #tpu.dot_dimension_numbers<[1], [0], [0], [1], [0, 0, 1, 1], [], []>} : vector<8x128xbf16>, vector<128x128xbf16>, vector<8x128xf32> -> vector<8x128xf32>
    %160 = arith.addf %157, %159 : vector<8x128xf32>
    %cst_60 = arith.constant 2.000000e+00 : f32
    %161 = vector.broadcast %cst_60 : f32 to vector<8x128xf32>
    %162 = arith.mulf %161, %160 : vector<8x128xf32>
    %163 = arith.select %5, %162, %160 : vector<8x128xi1>, vector<8x128xf32>
    %164 = arith.negf %163 : vector<8x128xf32>
    %165 = math.exp %164 : vector<8x128xf32>
    %cst_61 = arith.constant 1.000000e+00 : f32
    %166 = vector.broadcast %cst_61 : f32 to vector<8x128xf32>
    %167 = arith.addf %166, %165 : vector<8x128xf32>
    %168 = arith.divf %166, %167 : vector<8x128xf32>
    %cst_62 = arith.constant 2.000000e+00 : f32
    %169 = vector.broadcast %cst_62 : f32 to vector<8x128xf32>
    %170 = arith.mulf %169, %168 : vector<8x128xf32>
    %cst_63 = arith.constant 1.000000e+00 : f32
    %171 = vector.broadcast %cst_63 : f32 to vector<8x128xf32>
    %172 = arith.subf %170, %171 : vector<8x128xf32>
    %173 = arith.select %5, %172, %168 : vector<8x128xi1>, vector<8x128xf32>
    %c64_i32_64 = arith.constant 64 : i32
    %174 = tpu.dynamic_rotate %173 by %c64_i32_64 dim 1 : vector<8x128xf32>, i32 -> vector<8x128xf32>
    %175 = arith.mulf %173, %174 : vector<8x128xf32>
    %176 = arith.mulf %174, %153 : vector<8x128xf32>
    %c32_i32_65 = arith.constant 32 : i32
    %177 = tpu.dynamic_rotate %175 by %c32_i32_65 dim 1 : vector<8x128xf32>, i32 -> vector<8x128xf32>
    %178 = arith.addf %176, %177 : vector<8x128xf32>
    %179 = math.tanh %178 : vector<8x128xf32>
    %180 = arith.mulf %173, %179 : vector<8x128xf32>
    %c7 = arith.constant 7 : index
    %c0_66 = arith.constant 0 : index
    %c0_67 = arith.constant 0 : index
    %181 = vector.load %arg1[%c7, %c0_66, %c0_67] : memref<8x8x128xf32, #tpu.memory_space<vmem>>, vector<1x8x128xf32>
    %182 = vector.shape_cast %181 : vector<1x8x128xf32> to vector<8x128xf32>
    %183 = arith.truncf %180 : vector<8x128xf32> to vector<8x128xbf16>
    %cst_68 = arith.constant dense<0.000000e+00> : vector<8x128xf32>
    %184 = tpu.matmul %183, %0, %cst_68 {dimension_numbers = #tpu.dot_dimension_numbers<[1], [0], [0], [1], [0, 0, 1, 1], [], []>} : vector<8x128xbf16>, vector<128x128xbf16>, vector<8x128xf32> -> vector<8x128xf32>
    %185 = arith.addf %182, %184 : vector<8x128xf32>
    %cst_69 = arith.constant 2.000000e+00 : f32
    %186 = vector.broadcast %cst_69 : f32 to vector<8x128xf32>
    %187 = arith.mulf %186, %185 : vector<8x128xf32>
    %188 = arith.select %5, %187, %185 : vector<8x128xi1>, vector<8x128xf32>
    %189 = arith.negf %188 : vector<8x128xf32>
    %190 = math.exp %189 : vector<8x128xf32>
    %cst_70 = arith.constant 1.000000e+00 : f32
    %191 = vector.broadcast %cst_70 : f32 to vector<8x128xf32>
    %192 = arith.addf %191, %190 : vector<8x128xf32>
    %193 = arith.divf %191, %192 : vector<8x128xf32>
    %cst_71 = arith.constant 2.000000e+00 : f32
    %194 = vector.broadcast %cst_71 : f32 to vector<8x128xf32>
    %195 = arith.mulf %194, %193 : vector<8x128xf32>
    %cst_72 = arith.constant 1.000000e+00 : f32
    %196 = vector.broadcast %cst_72 : f32 to vector<8x128xf32>
    %197 = arith.subf %195, %196 : vector<8x128xf32>
    %198 = arith.select %5, %197, %193 : vector<8x128xi1>, vector<8x128xf32>
    %c64_i32_73 = arith.constant 64 : i32
    %199 = tpu.dynamic_rotate %198 by %c64_i32_73 dim 1 : vector<8x128xf32>, i32 -> vector<8x128xf32>
    %200 = arith.mulf %198, %199 : vector<8x128xf32>
    %201 = arith.mulf %199, %178 : vector<8x128xf32>
    %c32_i32_74 = arith.constant 32 : i32
    %202 = tpu.dynamic_rotate %200 by %c32_i32_74 dim 1 : vector<8x128xf32>, i32 -> vector<8x128xf32>
    %203 = arith.addf %201, %202 : vector<8x128xf32>
    %204 = math.tanh %203 : vector<8x128xf32>
    %205 = arith.mulf %198, %204 : vector<8x128xf32>
    %c0_75 = arith.constant 0 : index
    %c0_76 = arith.constant 0 : index
    %206 = vector.load %arg5[%c0_75, %c0_76] : memref<1x128xf32, #tpu.memory_space<vmem>>, vector<1x128xf32>
    %207 = vector.broadcast %206 : vector<1x128xf32> to vector<8x128xf32>
    %208 = arith.mulf %205, %207 : vector<8x128xf32>
    %cst_77 = arith.constant dense<0.000000e+00> : vector<8xf32>
    %209 = vector.multi_reduction <add>, %208, %cst_77 [1] : vector<8x128xf32> to vector<8xf32>
    %210 = vector.shape_cast %209 : vector<8xf32> to vector<8x1xf32>
    %c0_78 = arith.constant 0 : index
    %211 = memref.load %arg6[%c0_78] : memref<1xf32, #tpu.memory_space<smem>>
    %212 = vector.broadcast %211 : f32 to vector<8x1xf32>
    %213 = arith.addf %210, %212 : vector<8x1xf32>
    %214 = arith.negf %213 : vector<8x1xf32>
    %215 = math.exp %214 : vector<8x1xf32>
    %cst_79 = arith.constant 1.000000e+00 : f32
    %216 = vector.broadcast %cst_79 : f32 to vector<8x1xf32>
    %217 = arith.addf %216, %215 : vector<8x1xf32>
    %218 = arith.divf %216, %217 : vector<8x1xf32>
    %219 = vector.shape_cast %218 : vector<8x1xf32> to vector<8x1xf32>
    %220 = vector.broadcast %219 : vector<8x1xf32> to vector<8x128xf32>
    %c0_80 = arith.constant 0 : index
    %c0_81 = arith.constant 0 : index
    %221 = vector.load %arg7[%c0_80, %c0_81] : memref<8x128xf32, #tpu.memory_space<vmem>>, vector<8x128xf32>
    tpu.vector_store %arg7[%c0_80, %c0_81], %220 {strides = array<i32>} : memref<8x128xf32, #tpu.memory_space<vmem>>, vector<8x128xf32>,
    return
  }
  func.func @transform_0(%arg0: i32) -> (i32, i32, i32) {
    %c0_i32 = arith.constant 0 : i32
    %c0_i32_0 = arith.constant 0 : i32
    %c0_i32_1 = arith.constant 0 : i32
    return %c0_i32, %arg0, %c0_i32_0 : i32, i32, i32
  }
  func.func @transform_1(%arg0: i32) -> (i32, i32) {
    %c0_i32 = arith.constant 0 : i32
    %c0_i32_0 = arith.constant 0 : i32
    return %arg0, %c0_i32 : i32, i32
  }
  func.func @transform_2(%arg0: i32) -> (i32, i32) {
    %c0_i32 = arith.constant 0 : i32
    %c0_i32_0 = arith.constant 0 : i32
    return %arg0, %c0_i32 : i32, i32
  }
  func.func @transform_3(%arg0: i32) -> (i32, i32) {
    %c0_i32 = arith.constant 0 : i32
    %c0_i32_0 = arith.constant 0 : i32
    %c0_i32_1 = arith.constant 0 : i32
    return %c0_i32, %c0_i32_0 : i32, i32
  }
  func.func @transform_4(%arg0: i32) -> (i32, i32) {
    %c0_i32 = arith.constant 0 : i32
    %c0_i32_0 = arith.constant 0 : i32
    %c0_i32_1 = arith.constant 0 : i32
    return %c0_i32, %c0_i32_0 : i32, i32
  }
  func.func @transform_5(%arg0: i32) -> i32 {
    %c0_i32 = arith.constant 0 : i32
    %c0_i32_0 = arith.constant 0 : i32
    return %c0_i32 : i32
  }
  func.func @transform_6(%arg0: i32) -> (i32, i32) {
    %c0_i32 = arith.constant 0 : i32
    %c0_i32_0 = arith.constant 0 : i32
    return %arg0, %c0_i32 : i32, i32
  }
}

</mosaic_0001>

<llo_original>
// kernel: tpu_custom_call.1
$region0: #{tpu_custom_call.1}
  #allocation0 [shape = 'u32[]', space=smem, size = 0x4, offset = 0x4, fixed_abs, tag = 'smem constant byte address 0x4 - core index']
  #allocation1 [shape = 'u32[144,128]{1,0:T(1,128)}', space=vmem, size = 0x12000, scoped, tag = 'internal scratch']
  #allocation2 [shape = 'f32[1]{0:T(128)S(6)}', space=smem, size = 0x200, scoped, tag = 'scoped memory for tpu_custom_call.1']
  %s0 = inlined_call_operand.hbm [shape: f32[8,8,128], index: 0, kind: input, shape index: {}]
  %s1 = inlined_call_operand.hbm [shape: f32[8,128], index: 1, kind: input, shape index: {}]
  %s2 = inlined_call_operand.vmem [shape: f32[8,128], index: 2, kind: input, shape index: {}]
  %s3 = inlined_call_operand.hbm [shape: bf16[128,128], index: 3, kind: input, shape index: {}]
  %s4 = inlined_call_operand.vmem [shape: f32[1,128], index: 4, kind: input, shape index: {}]
  %s5 = inlined_call_operand.<no memory space> [shape: f32[1], index: 5, kind: input, shape index: {}]
  %s6 = inlined_call_operand.hbm [shape: f32[8,128], index: 6, kind: output, shape index: {}]
  %s7 = sld [smem:[#allocation0]]
  $region46: #{tpu_custom_call.1} parent=0
    _
  %s9 = ssub.s32 1, %s7
  %s10 = scalar_select 0, %s9, %s7
  %11 = sst [smem:[#allocation2]] %s5
  $region1: #{tpu_custom_call.1} parent=0
    #allocation3 [shape = 'u8[32768]{0}', space=vmem, size = 0x8000, scoped, tag = 'input window, operand 0, single buffered']
    #allocation4 [shape = 's32[1]{0}', space=sflag, size = 0x4, scoped, tag = 'scoped memory for tpu_custom_call.1']
    #allocation5 [shape = 's32[1]{0}', space=sflag, size = 0x4, scoped, tag = 'scoped memory for tpu_custom_call.1']
    #allocation6 [shape = 'u8[4096]{0}', space=vmem, size = 0x1000, scoped, tag = 'input window, operand 1, single buffered']
    #allocation7 [shape = 's32[1]{0}', space=sflag, size = 0x4, scoped, tag = 'scoped memory for tpu_custom_call.1']
    #allocation8 [shape = 'u8[32768]{0}', space=vmem, size = 0x8000, scoped, tag = 'input window, operand 3, single buffered']
    #allocation9 [shape = 'u8[4096]{0}', space=vmem, size = 0x1000, scoped, tag = 'output window, operand 0, single buffered']
    %12 = vsyncpa [#allocation4], 0
    %13 = vsyncpa [#allocation7], 0
    %14 = vsyncpa [#allocation5], 0
    // Predicated region
    $region2: #{tpu_custom_call.1} parent=1 // pred_check
      _
    $region3: #{tpu_custom_call.1} parent=1 // pred_check_branch
      %16 = sbr.rel (0) target = $region5
    $region4: #{tpu_custom_call.1} parent=1 // pred_region
      %s18 = ssub.s32 1024, 1024
      %19 = vsyncadd [#allocation4], %s18
      %s20 = sshll.u32 [#allocation3], 4
      %s21 = int_to_ptr.vmem [resolvable:$true] %s20
      %26 = dma.hbm_to_vmem [thread:$0]  %s0, 1024, %s21, [#allocation4], 128, 128, 8
    $region5: #{tpu_custom_call.1} parent=1 // pred_fallthru
      _
    // Predicated region
    $region6: #{tpu_custom_call.1} parent=1 // pred_check
      _
    $region7: #{tpu_custom_call.1} parent=1 // pred_check_branch
      %28 = sbr.rel (0) target = $region9
    $region8: #{tpu_custom_call.1} parent=1 // pred_region
      %s30 = ssub.s32 128, 128
      %31 = vsyncadd [#allocation7], %s30
      %s33 = sshll.u32 [#allocation6], 4
      %s34 = int_to_ptr.vmem [resolvable:$true] %s33
      %36 = dma.hbm_to_vmem [thread:$0]  %s1, 128, %s34, [#allocation7]
    $region9: #{tpu_custom_call.1} parent=1 // pred_fallthru
      _
    // Predicated region
    $region10: #{tpu_custom_call.1} parent=1 // pred_check
      _
    $region11: #{tpu_custom_call.1} parent=1 // pred_check_branch
      %38 = sbr.rel (0) target = $region13
    $region12: #{tpu_custom_call.1} parent=1 // pred_region
      _
    $region13: #{tpu_custom_call.1} parent=1 // pred_fallthru
      _
    // Predicated region
    $region14: #{tpu_custom_call.1} parent=1 // pred_check
      _
    $region15: #{tpu_custom_call.1} parent=1 // pred_check_branch
      %40 = sbr.rel (0) target = $region17
    $region16: #{tpu_custom_call.1} parent=1 // pred_region
      %s42 = ssub.s32 1024, 1024
      %43 = vsyncadd [#allocation7], %s42
      %s44 = sshll.u32 [#allocation8], 4
      %s45 = int_to_ptr.vmem [resolvable:$true] %s44
      %50 = dma.hbm_to_vmem [thread:$0]  %s3, 1024, %s45, [#allocation7], 64, 64, 4
    $region17: #{tpu_custom_call.1} parent=1 // pred_fallthru
      _
    // Predicated region
    $region18: #{tpu_custom_call.1} parent=1 // pred_check
      _
    $region19: #{tpu_custom_call.1} parent=1 // pred_check_branch
      %52 = sbr.rel (0) target = $region21
    $region20: #{tpu_custom_call.1} parent=1 // pred_region
      _
    $region21: #{tpu_custom_call.1} parent=1 // pred_fallthru
      _
    // Predicated region
    $region22: #{tpu_custom_call.1} parent=1 // pred_check
      _
    $region23: #{tpu_custom_call.1} parent=1 // pred_check_branch
      %54 = sbr.rel (0) target = $region25
    $region24: #{tpu_custom_call.1} parent=1 // pred_region
      _
    $region25: #{tpu_custom_call.1} parent=1 // pred_fallthru
      _
    // Predicated region
    $region26: #{tpu_custom_call.1} parent=1 // pred_check
      _
    $region27: #{tpu_custom_call.1} parent=1 // pred_check_branch
      %56 = sbr.rel (0) target = $region29
    $region28: #{tpu_custom_call.1} parent=1 // pred_region
      %57 = dma.done [#allocation4], 1024
    $region29: #{tpu_custom_call.1} parent=1 // pred_fallthru
      _
    // Predicated region
    $region30: #{tpu_custom_call.1} parent=1 // pred_check
      _
    $region31: #{tpu_custom_call.1} parent=1 // pred_check_branch
      %59 = sbr.rel (0) target = $region33
    $region32: #{tpu_custom_call.1} parent=1 // pred_region
      %60 = dma.done [#allocation7], 128
    $region33: #{tpu_custom_call.1} parent=1 // pred_fallthru
      _
    // Predicated region
    $region34: #{tpu_custom_call.1} parent=1 // pred_check
      _
    $region35: #{tpu_custom_call.1} parent=1 // pred_check_branch
      %62 = sbr.rel (0) target = $region37
    $region36: #{tpu_custom_call.1} parent=1 // pred_region
      %63 = dma.done [#allocation7], 1024
    $region37: #{tpu_custom_call.1} parent=1 // pred_fallthru
      _
    %v65 = vld [vmem:[#allocation8] sm:$0xf]
    %v66 = vld [vmem:[#allocation8 + $0x4] sm:$0xf]
    %v67 = vld [vmem:[#allocation8 + $0x8] sm:$0xf]
    %v68 = vld [vmem:[#allocation8 + $0xc] sm:$0xf]
    %v69 = vld [vmem:[#allocation8 + $0x10] sm:$0xf]
    %v70 = vld [vmem:[#allocation8 + $0x14] sm:$0xf]
    %v71 = vld [vmem:[#allocation8 + $0x18] sm:$0xf]
    %v72 = vld [vmem:[#allocation8 + $0x1c] sm:$0xf]
    %v73 = vld [vmem:[#allocation8 + $0x20] sm:$0xf]
    %v74 = vld [vmem:[#allocation8 + $0x24] sm:$0xf]
    %v75 = vld [vmem:[#allocation8 + $0x28] sm:$0xf]
    %v76 = vld [vmem:[#allocation8 + $0x2c] sm:$0xf]
    %v77 = vld [vmem:[#allocation8 + $0x30] sm:$0xf]
    %v78 = vld [vmem:[#allocation8 + $0x34] sm:$0xf]
    %v79 = vld [vmem:[#allocation8 + $0x38] sm:$0xf]
    %v80 = vld [vmem:[#allocation8 + $0x3c] sm:$0xf]
    %v81 = vld [vmem:[#allocation6] sm:$0xff]
    %v82 = vld [vmem:[%s2] sm:$0xff]
    %v83 = vlaneseq
    %v84 = vand.u32 %v83, 127
    %vm85 = vcmp.ge.s32.totalorder %v84, 96
    %v86 = vld [vmem:[#allocation3] sm:$0xff]
    %v87 = vpack.c.bf16 %v81, %v81
    %v104 = vunpack.c.l.b16 %v65
    %v105 = vunpack.c.l.b16 %v66
    %v106 = vunpack.c.l.b16 %v67
    %v107 = vunpack.c.l.b16 %v68
    %v108 = vunpack.c.l.b16 %v69
    %v109 = vunpack.c.l.b16 %v70
    %v110 = vunpack.c.l.b16 %v71
    %v111 = vunpack.c.l.b16 %v72
    %v112 = vunpack.c.l.b16 %v73
    %v113 = vunpack.c.l.b16 %v74
    %v114 = vunpack.c.l.b16 %v75
    %v115 = vunpack.c.l.b16 %v76
    %v116 = vunpack.c.l.b16 %v77
    %v117 = vunpack.c.l.b16 %v78
    %v118 = vunpack.c.l.b16 %v79
    %v119 = vunpack.c.l.b16 %v80
    %v120 = vpack.c.b16 %v105, %v104
    %v121 = vpack.c.b16 %v107, %v106
    %v122 = vpack.c.b16 %v109, %v108
    %v123 = vpack.c.b16 %v111, %v110
    %v124 = vpack.c.b16 %v113, %v112
    %v125 = vpack.c.b16 %v115, %v114
    %v126 = vpack.c.b16 %v117, %v116
    %v127 = vpack.c.b16 %v119, %v118
    %136 = vmatprep.subr.bf16.mxu0 0
    %137 = vmatpush1.bf16.msra.mxu0 %v120
    %138 = vmatprep.subr.bf16.mxu0 0
    %139 = vmatpush1.bf16.msra.mxu0 %v121
    %140 = vmatprep.subr.bf16.mxu0 0
    %141 = vmatpush1.bf16.msra.mxu0 %v122
    %142 = vmatprep.subr.bf16.mxu0 0
    %143 = vmatpush1.bf16.msra.mxu0 %v123
    %144 = vmatprep.subr.bf16.mxu0 0
    %145 = vmatpush1.bf16.msra.mxu0 %v124
    %146 = vmatprep.subr.bf16.mxu0 0
    %147 = vmatpush1.bf16.msra.mxu0 %v125
    %148 = vmatprep.subr.bf16.mxu0 0
    %149 = vmatpush1.bf16.msra.mxu0 %v126
    %150 = vmatprep.subr.bf16.mxu0 0
    %151 = vmatpush1.bf16.msra.mxu0 %v127
    %152 = vmatprep.subr.bf16.mxu0 0
    %153 = vmatpush1.bf16.msra.mxu0 0
    %154 = vmatprep.subr.bf16.mxu0 0
    %155 = vmatpush1.bf16.msra.mxu0 0
    %156 = vmatprep.subr.bf16.mxu0 0
    %157 = vmatpush1.bf16.msra.mxu0 0
    %158 = vmatprep.subr.bf16.mxu0 0
    %159 = vmatpush1.bf16.msra.mxu0 0
    %160 = vmatprep.subr.bf16.mxu0 0
    %161 = vmatpush1.bf16.msra.mxu0 0
    %162 = vmatprep.subr.bf16.mxu0 0
    %163 = vmatpush1.bf16.msra.mxu0 0
    %164 = vmatprep.subr.bf16.mxu0 0
    %165 = vmatpush1.bf16.msra.mxu0 0
    %166 = vmatprep.subr.bf16.mxu0 0
    %167 = vmatpush1.bf16.msra.mxu0 0
    %168 = vmatprep.mubr.bf16.mxu0 0
    %169 = vmatmul.mubr.bf16.gmra.mrb[0].mxu0 %v87
    %v170 = vpop.f32.mrb[0].mxu0
    %v171 = vadd.f32 0.0, %v170
    %v172 = vpop.f32.mrb[0].mxu0
    %v173 = vpop.f32.mrb[0].mxu0
    %v174 = vpop.f32.mrb[0].mxu0
    %175 = vdwg.mxu0
    %v176 = vadd.f32 %v86, %v171
    %v177 = vmul.f32 %v176, 2.0
    %v178 = vsel %vm85, %v177, %v176
    %v179 = vxor.u32 %v178, 2147483648
    %v180 = vmul.f32 %v179, 1.442695
    %v181 = vpow.pop %v180
    %v182 = vadd.f32 %v181, 1.0
    %v183 = vrcp.pop %v182
    %v184 = vmul.f32 1.0, %v183
    %v185 = vmul.f32 %v184, 2.0
    %v186 = vsub.f32 %v185, 1.0
    %v187 = vsel %vm85, %v186, %v184
    %188 = vrot.lane.b32.xlu0 %v187, 64
    %v189 = vpop.permute.xlu0 %188
    %v190 = vmul.f32 %v187, %v189
    %v191 = vmul.f32 %v189, %v82
    %192 = vrot.lane.b32.xlu0 %v190, 32
    %v193 = vpop.permute.xlu0 %192
    %v194 = vadd.f32 %v191, %v193
    %v195 = vtanh.pop %v194
    %v196 = vmul.f32 %v187, %v195
    %s197 = scalar_lea.vmem [#allocation3], 8
    %v198 = vld [vmem:[%s197] sm:$0xff]
    %v199 = vpack.c.bf16 %v196, %v196
    %200 = vmatprep.subr.bf16.mxu0 0
    %201 = vmatpush1.bf16.msra.mxu0 %v120
    %202 = vmatprep.subr.bf16.mxu0 0
    %203 = vmatpush1.bf16.msra.mxu0 %v121
    %204 = vmatprep.subr.bf16.mxu0 0
    %205 = vmatpush1.bf16.msra.mxu0 %v122
    %206 = vmatprep.subr.bf16.mxu0 0
    %207 = vmatpush1.bf16.msra.mxu0 %v123
    %208 = vmatprep.subr.bf16.mxu0 0
    %209 = vmatpush1.bf16.msra.mxu0 %v124
    %210 = vmatprep.subr.bf16.mxu0 0
    %211 = vmatpush1.bf16.msra.mxu0 %v125
    %212 = vmatprep.subr.bf16.mxu0 0
    %213 = vmatpush1.bf16.msra.mxu0 %v126
    %214 = vmatprep.subr.bf16.mxu0 0
    %215 = vmatpush1.bf16.msra.mxu0 %v127
    %216 = vmatprep.subr.bf16.mxu0 0
    %217 = vmatpush1.bf16.msra.mxu0 0
    %218 = vmatprep.subr.bf16.mxu0 0
    %219 = vmatpush1.bf16.msra.mxu0 0
    %220 = vmatprep.subr.bf16.mxu0 0
    %221 = vmatpush1.bf16.msra.mxu0 0
    %222 = vmatprep.subr.bf16.mxu0 0
    %223 = vmatpush1.bf16.msra.mxu0 0
    %224 = vmatprep.subr.bf16.mxu0 0
    %225 = vmatpush1.bf16.msra.mxu0 0
    %226 = vmatprep.subr.bf16.mxu0 0
    %227 = vmatpush1.bf16.msra.mxu0 0
    %228 = vmatprep.subr.bf16.mxu0 0
    %229 = vmatpush1.bf16.msra.mxu0 0
    %230 = vmatprep.subr.bf16.mxu0 0
    %231 = vmatpush1.bf16.msra.mxu0 0
    %232 = vmatprep.mubr.bf16.mxu0 0
    %233 = vmatmul.mubr.bf16.gmra.mrb[0].mxu0 %v199
    %v234 = vpop.f32.mrb[0].mxu0
    %v235 = vadd.f32 0.0, %v234
    %v236 = vpop.f32.mrb[0].mxu0
    %v237 = vpop.f32.mrb[0].mxu0
    %v238 = vpop.f32.mrb[0].mxu0
    %239 = vdwg.mxu0
    %v240 = vadd.f32 %v198, %v235
    %v241 = vmul.f32 %v240, 2.0
    %v242 = vsel %vm85, %v241, %v240
    %v243 = vxor.u32 %v242, 2147483648
    %v244 = vmul.f32 %v243, 1.442695
    %v245 = vpow.pop %v244
    %v246 = vadd.f32 %v245, 1.0
    %v247 = vrcp.pop %v246
    %v248 = vmul.f32 1.0, %v247
    %v249 = vmul.f32 %v248, 2.0
    %v250 = vsub.f32 %v249, 1.0
    %v251 = vsel %vm85, %v250, %v248
    %252 = vrot.lane.b32.xlu0 %v251, 64
    %v253 = vpop.permute.xlu0 %252
    %v254 = vmul.f32 %v251, %v253
    %v255 = vmul.f32 %v253, %v194
    %256 = vrot.lane.b32.xlu0 %v254, 32
    %v257 = vpop.permute.xlu0 %256
    %v258 = vadd.f32 %v255, %v257
    %v259 = vtanh.pop %v258
    %v260 = vmul.f32 %v251, %v259
    %s261 = scalar_lea.vmem [#allocation3], 16
    %v262 = vld [vmem:[%s261] sm:$0xff]
    %v263 = vpack.c.bf16 %v260, %v260
    %264 = vmatprep.subr.bf16.mxu0 0
    %265 = vmatpush1.bf16.msra.mxu0 %v120
    %266 = vmatprep.subr.bf16.mxu0 0
    %267 = vmatpush1.bf16.msra.mxu0 %v121
    %268 = vmatprep.subr.bf16.mxu0 0
    %269 = vmatpush1.bf16.msra.mxu0 %v122
    %270 = vmatprep.subr.bf16.mxu0 0
    %271 = vmatpush1.bf16.msra.mxu0 %v123
    %272 = vmatprep.subr.bf16.mxu0 0
    %273 = vmatpush1.bf16.msra.mxu0 %v124
    %274 = vmatprep.subr.bf16.mxu0 0
    %275 = vmatpush1.bf16.msra.mxu0 %v125
    %276 = vmatprep.subr.bf16.mxu0 0
    %277 = vmatpush1.bf16.msra.mxu0 %v126
    %278 = vmatprep.subr.bf16.mxu0 0
    %279 = vmatpush1.bf16.msra.mxu0 %v127
    %280 = vmatprep.subr.bf16.mxu0 0
    %281 = vmatpush1.bf16.msra.mxu0 0
    %282 = vmatprep.subr.bf16.mxu0 0
    %283 = vmatpush1.bf16.msra.mxu0 0
    %284 = vmatprep.subr.bf16.mxu0 0
    %285 = vmatpush1.bf16.msra.mxu0 0
    %286 = vmatprep.subr.bf16.mxu0 0
    %287 = vmatpush1.bf16.msra.mxu0 0
    %288 = vmatprep.subr.bf16.mxu0 0
    %289 = vmatpush1.bf16.msra.mxu0 0
    %290 = vmatprep.subr.bf16.mxu0 0
    %291 = vmatpush1.bf16.msra.mxu0 0
    %292 = vmatprep.subr.bf16.mxu0 0
    %293 = vmatpush1.bf16.msra.mxu0 0
    %294 = vmatprep.subr.bf16.mxu0 0
    %295 = vmatpush1.bf16.msra.mxu0 0
    %296 = vmatprep.mubr.bf16.mxu0 0
    %297 = vmatmul.mubr.bf16.gmra.mrb[0].mxu0 %v263
    %v298 = vpop.f32.mrb[0].mxu0
    %v299 = vadd.f32 0.0, %v298
    %v300 = vpop.f32.mrb[0].mxu0
    %v301 = vpop.f32.mrb[0].mxu0
    %v302 = vpop.f32.mrb[0].mxu0
    %303 = vdwg.mxu0
    %v304 = vadd.f32 %v262, %v299
    %v305 = vmul.f32 %v304, 2.0
    %v306 = vsel %vm85, %v305, %v304
    %v307 = vxor.u32 %v306, 2147483648
    %v308 = vmul.f32 %v307, 1.442695
    %v309 = vpow.pop %v308
    %v310 = vadd.f32 %v309, 1.0
    %v311 = vrcp.pop %v310
    %v312 = vmul.f32 1.0, %v311
    %v313 = vmul.f32 %v312, 2.0
    %v314 = vsub.f32 %v313, 1.0
    %v315 = vsel %vm85, %v314, %v312
    %316 = vrot.lane.b32.xlu0 %v315, 64
    %v317 = vpop.permute.xlu0 %316
    %v318 = vmul.f32 %v315, %v317
    %v319 = vmul.f32 %v317, %v258
    %320 = vrot.lane.b32.xlu0 %v318, 32
    %v321 = vpop.permute.xlu0 %320
    %v322 = vadd.f32 %v319, %v321
    %v323 = vtanh.pop %v322
    %v324 = vmul.f32 %v315, %v323
    %s325 = scalar_lea.vmem [#allocation3], 24
    %v326 = vld [vmem:[%s325] sm:$0xff]
    %v327 = vpack.c.bf16 %v324, %v324
    %328 = vmatprep.subr.bf16.mxu0 0
    %329 = vmatpush1.bf16.msra.mxu0 %v120
    %330 = vmatprep.subr.bf16.mxu0 0
    %331 = vmatpush1.bf16.msra.mxu0 %v121
    %332 = vmatprep.subr.bf16.mxu0 0
    %333 = vmatpush1.bf16.msra.mxu0 %v122
    %334 = vmatprep.subr.bf16.mxu0 0
    %335 = vmatpush1.bf16.msra.mxu0 %v123
    %336 = vmatprep.subr.bf16.mxu0 0
    %337 = vmatpush1.bf16.msra.mxu0 %v124
    %338 = vmatprep.subr.bf16.mxu0 0
    %339 = vmatpush1.bf16.msra.mxu0 %v125
    %340 = vmatprep.subr.bf16.mxu0 0
    %341 = vmatpush1.bf16.msra.mxu0 %v126
    %342 = vmatprep.subr.bf16.mxu0 0
    %343 = vmatpush1.bf16.msra.mxu0 %v127
    %344 = vmatprep.subr.bf16.mxu0 0
    %345 = vmatpush1.bf16.msra.mxu0 0
    %346 = vmatprep.subr.bf16.mxu0 0
    %347 = vmatpush1.bf16.msra.mxu0 0
    %348 = vmatprep.subr.bf16.mxu0 0
    %349 = vmatpush1.bf16.msra.mxu0 0
    %350 = vmatprep.subr.bf16.mxu0 0
    %351 = vmatpush1.bf16.msra.mxu0 0
    %352 = vmatprep.subr.bf16.mxu0 0
    %353 = vmatpush1.bf16.msra.mxu0 0
    %354 = vmatprep.subr.bf16.mxu0 0
    %355 = vmatpush1.bf16.msra.mxu0 0
    %356 = vmatprep.subr.bf16.mxu0 0
    %357 = vmatpush1.bf16.msra.mxu0 0
    %358 = vmatprep.subr.bf16.mxu0 0
    %359 = vmatpush1.bf16.msra.mxu0 0
    %360 = vmatprep.mubr.bf16.mxu0 0
    %361 = vmatmul.mubr.bf16.gmra.mrb[0].mxu0 %v327
    %v362 = vpop.f32.mrb[0].mxu0
    %v363 = vadd.f32 0.0, %v362
    %v364 = vpop.f32.mrb[0].mxu0
    %v365 = vpop.f32.mrb[0].mxu0
    %v366 = vpop.f32.mrb[0].mxu0
    %367 = vdwg.mxu0
    %v368 = vadd.f32 %v326, %v363
    %v369 = vmul.f32 %v368, 2.0
    %v370 = vsel %vm85, %v369, %v368
    %v371 = vxor.u32 %v370, 2147483648
    %v372 = vmul.f32 %v371, 1.442695
    %v373 = vpow.pop %v372
    %v374 = vadd.f32 %v373, 1.0
    %v375 = vrcp.pop %v374
    %v376 = vmul.f32 1.0, %v375
    %v377 = vmul.f32 %v376, 2.0
    %v378 = vsub.f32 %v377, 1.0
    %v379 = vsel %vm85, %v378, %v376
    %380 = vrot.lane.b32.xlu0 %v379, 64
    %v381 = vpop.permute.xlu0 %380
    %v382 = vmul.f32 %v379, %v381
    %v383 = vmul.f32 %v381, %v322
    %384 = vrot.lane.b32.xlu0 %v382, 32
    %v385 = vpop.permute.xlu0 %384
    %v386 = vadd.f32 %v383, %v385
    %v387 = vtanh.pop %v386
    %v388 = vmul.f32 %v379, %v387
    %s389 = scalar_lea.vmem [#allocation3], 32
    %v390 = vld [vmem:[%s389] sm:$0xff]
    %v391 = vpack.c.bf16 %v388, %v388
    %392 = vmatprep.subr.bf16.mxu0 0
    %393 = vmatpush1.bf16.msra.mxu0 %v120
    %394 = vmatprep.subr.bf16.mxu0 0
    %395 = vmatpush1.bf16.msra.mxu0 %v121
    %396 = vmatprep.subr.bf16.mxu0 0
    %397 = vmatpush1.bf16.msra.mxu0 %v122
    %398 = vmatprep.subr.bf16.mxu0 0
    %399 = vmatpush1.bf16.msra.mxu0 %v123
    %400 = vmatprep.subr.bf16.mxu0 0
    %401 = vmatpush1.bf16.msra.mxu0 %v124
    %402 = vmatprep.subr.bf16.mxu0 0
    %403 = vmatpush1.bf16.msra.mxu0 %v125
    %404 = vmatprep.subr.bf16.mxu0 0
    %405 = vmatpush1.bf16.msra.mxu0 %v126
    %406 = vmatprep.subr.bf16.mxu0 0
    %407 = vmatpush1.bf16.msra.mxu0 %v127
    %408 = vmatprep.subr.bf16.mxu0 0
    %409 = vmatpush1.bf16.msra.mxu0 0
    %410 = vmatprep.subr.bf16.mxu0 0
    %411 = vmatpush1.bf16.msra.mxu0 0
    %412 = vmatprep.subr.bf16.mxu0 0
    %413 = vmatpush1.bf16.msra.mxu0 0
    %414 = vmatprep.subr.bf16.mxu0 0
    %415 = vmatpush1.bf16.msra.mxu0 0
    %416 = vmatprep.subr.bf16.mxu0 0
    %417 = vmatpush1.bf16.msra.mxu0 0
    %418 = vmatprep.subr.bf16.mxu0 0
    %419 = vmatpush1.bf16.msra.mxu0 0
    %420 = vmatprep.subr.bf16.mxu0 0
    %421 = vmatpush1.bf16.msra.mxu0 0
    %422 = vmatprep.subr.bf16.mxu0 0
    %423 = vmatpush1.bf16.msra.mxu0 0
    %424 = vmatprep.mubr.bf16.mxu0 0
    %425 = vmatmul.mubr.bf16.gmra.mrb[0].mxu0 %v391
    %v426 = vpop.f32.mrb[0].mxu0
    %v427 = vadd.f32 0.0, %v426
    %v428 = vpop.f32.mrb[0].mxu0
    %v429 = vpop.f32.mrb[0].mxu0
    %v430 = vpop.f32.mrb[0].mxu0
    %431 = vdwg.mxu0
    %v432 = vadd.f32 %v390, %v427
    %v433 = vmul.f32 %v432, 2.0
    %v434 = vsel %vm85, %v433, %v432
    %v435 = vxor.u32 %v434, 2147483648
    %v436 = vmul.f32 %v435, 1.442695
    %v437 = vpow.pop %v436
    %v438 = vadd.f32 %v437, 1.0
    %v439 = vrcp.pop %v438
    %v440 = vmul.f32 1.0, %v439
    %v441 = vmul.f32 %v440, 2.0
    %v442 = vsub.f32 %v441, 1.0
    %v443 = vsel %vm85, %v442, %v440
    %444 = vrot.lane.b32.xlu0 %v443, 64
    %v445 = vpop.permute.xlu0 %444
    %v446 = vmul.f32 %v443, %v445
    %v447 = vmul.f32 %v445, %v386
    %448 = vrot.lane.b32.xlu0 %v446, 32
    %v449 = vpop.permute.xlu0 %448
    %v450 = vadd.f32 %v447, %v449
    %v451 = vtanh.pop %v450
    %v452 = vmul.f32 %v443, %v451
    %s453 = scalar_lea.vmem [#allocation3], 40
    %v454 = vld [vmem:[%s453] sm:$0xff]
    %v455 = vpack.c.bf16 %v452, %v452
    %456 = vmatprep.subr.bf16.mxu0 0
    %457 = vmatpush1.bf16.msra.mxu0 %v120
    %458 = vmatprep.subr.bf16.mxu0 0
    %459 = vmatpush1.bf16.msra.mxu0 %v121
    %460 = vmatprep.subr.bf16.mxu0 0
    %461 = vmatpush1.bf16.msra.mxu0 %v122
    %462 = vmatprep.subr.bf16.mxu0 0
    %463 = vmatpush1.bf16.msra.mxu0 %v123
    %464 = vmatprep.subr.bf16.mxu0 0
    %465 = vmatpush1.bf16.msra.mxu0 %v124
    %466 = vmatprep.subr.bf16.mxu0 0
    %467 = vmatpush1.bf16.msra.mxu0 %v125
    %468 = vmatprep.subr.bf16.mxu0 0
    %469 = vmatpush1.bf16.msra.mxu0 %v126
    %470 = vmatprep.subr.bf16.mxu0 0
    %471 = vmatpush1.bf16.msra.mxu0 %v127
    %472 = vmatprep.subr.bf16.mxu0 0
    %473 = vmatpush1.bf16.msra.mxu0 0
    %474 = vmatprep.subr.bf16.mxu0 0
    %475 = vmatpush1.bf16.msra.mxu0 0
    %476 = vmatprep.subr.bf16.mxu0 0
    %477 = vmatpush1.bf16.msra.mxu0 0
    %478 = vmatprep.subr.bf16.mxu0 0
    %479 = vmatpush1.bf16.msra.mxu0 0
    %480 = vmatprep.subr.bf16.mxu0 0
    %481 = vmatpush1.bf16.msra.mxu0 0
    %482 = vmatprep.subr.bf16.mxu0 0
    %483 = vmatpush1.bf16.msra.mxu0 0
    %484 = vmatprep.subr.bf16.mxu0 0
    %485 = vmatpush1.bf16.msra.mxu0 0
    %486 = vmatprep.subr.bf16.mxu0 0
    %487 = vmatpush1.bf16.msra.mxu0 0
    %488 = vmatprep.mubr.bf16.mxu0 0
    %489 = vmatmul.mubr.bf16.gmra.mrb[0].mxu0 %v455
    %v490 = vpop.f32.mrb[0].mxu0
    %v491 = vadd.f32 0.0, %v490
    %v492 = vpop.f32.mrb[0].mxu0
    %v493 = vpop.f32.mrb[0].mxu0
    %v494 = vpop.f32.mrb[0].mxu0
    %495 = vdwg.mxu0
    %v496 = vadd.f32 %v454, %v491
    %v497 = vmul.f32 %v496, 2.0
    %v498 = vsel %vm85, %v497, %v496
    %v499 = vxor.u32 %v498, 2147483648
    %v500 = vmul.f32 %v499, 1.442695
    %v501 = vpow.pop %v500
    %v502 = vadd.f32 %v501, 1.0
    %v503 = vrcp.pop %v502
    %v504 = vmul.f32 1.0, %v503
    %v505 = vmul.f32 %v504, 2.0
    %v506 = vsub.f32 %v505, 1.0
    %v507 = vsel %vm85, %v506, %v504
    %508 = vrot.lane.b32.xlu0 %v507, 64
    %v509 = vpop.permute.xlu0 %508
    %v510 = vmul.f32 %v507, %v509
    %v511 = vmul.f32 %v509, %v450
    %512 = vrot.lane.b32.xlu0 %v510, 32
    %v513 = vpop.permute.xlu0 %512
    %v514 = vadd.f32 %v511, %v513
    %v515 = vtanh.pop %v514
    %v516 = vmul.f32 %v507, %v515
    %s517 = scalar_lea.vmem [#allocation3], 48
    %v518 = vld [vmem:[%s517] sm:$0xff]
    %v519 = vpack.c.bf16 %v516, %v516
    %520 = vmatprep.subr.bf16.mxu0 0
    %521 = vmatpush1.bf16.msra.mxu0 %v120
    %522 = vmatprep.subr.bf16.mxu0 0
    %523 = vmatpush1.bf16.msra.mxu0 %v121
    %524 = vmatprep.subr.bf16.mxu0 0
    %525 = vmatpush1.bf16.msra.mxu0 %v122
    %526 = vmatprep.subr.bf16.mxu0 0
    %527 = vmatpush1.bf16.msra.mxu0 %v123
    %528 = vmatprep.subr.bf16.mxu0 0
    %529 = vmatpush1.bf16.msra.mxu0 %v124
    %530 = vmatprep.subr.bf16.mxu0 0
    %531 = vmatpush1.bf16.msra.mxu0 %v125
    %532 = vmatprep.subr.bf16.mxu0 0
    %533 = vmatpush1.bf16.msra.mxu0 %v126
    %534 = vmatprep.subr.bf16.mxu0 0
    %535 = vmatpush1.bf16.msra.mxu0 %v127
    %536 = vmatprep.subr.bf16.mxu0 0
    %537 = vmatpush1.bf16.msra.mxu0 0
    %538 = vmatprep.subr.bf16.mxu0 0
    %539 = vmatpush1.bf16.msra.mxu0 0
    %540 = vmatprep.subr.bf16.mxu0 0
    %541 = vmatpush1.bf16.msra.mxu0 0
    %542 = vmatprep.subr.bf16.mxu0 0
    %543 = vmatpush1.bf16.msra.mxu0 0
    %544 = vmatprep.subr.bf16.mxu0 0
    %545 = vmatpush1.bf16.msra.mxu0 0
    %546 = vmatprep.subr.bf16.mxu0 0
    %547 = vmatpush1.bf16.msra.mxu0 0
    %548 = vmatprep.subr.bf16.mxu0 0
    %549 = vmatpush1.bf16.msra.mxu0 0
    %550 = vmatprep.subr.bf16.mxu0 0
    %551 = vmatpush1.bf16.msra.mxu0 0
    %552 = vmatprep.mubr.bf16.mxu0 0
    %553 = vmatmul.mubr.bf16.gmra.mrb[0].mxu0 %v519
    %v554 = vpop.f32.mrb[0].mxu0
    %v555 = vadd.f32 0.0, %v554
    %v556 = vpop.f32.mrb[0].mxu0
    %v557 = vpop.f32.mrb[0].mxu0
    %v558 = vpop.f32.mrb[0].mxu0
    %559 = vdwg.mxu0
    %v560 = vadd.f32 %v518, %v555
    %v561 = vmul.f32 %v560, 2.0
    %v562 = vsel %vm85, %v561, %v560
    %v563 = vxor.u32 %v562, 2147483648
    %v564 = vmul.f32 %v563, 1.442695
    %v565 = vpow.pop %v564
    %v566 = vadd.f32 %v565, 1.0
    %v567 = vrcp.pop %v566
    %v568 = vmul.f32 1.0, %v567
    %v569 = vmul.f32 %v568, 2.0
    %v570 = vsub.f32 %v569, 1.0
    %v571 = vsel %vm85, %v570, %v568
    %572 = vrot.lane.b32.xlu0 %v571, 64
    %v573 = vpop.permute.xlu0 %572
    %v574 = vmul.f32 %v571, %v573
    %v575 = vmul.f32 %v573, %v514
    %576 = vrot.lane.b32.xlu0 %v574, 32
    %v577 = vpop.permute.xlu0 %576
    %v578 = vadd.f32 %v575, %v577
    %v579 = vtanh.pop %v578
    %v580 = vmul.f32 %v571, %v579
    %s581 = scalar_lea.vmem [#allocation3], 56
    %v582 = vld [vmem:[%s581] sm:$0xff]
    %v583 = vpack.c.bf16 %v580, %v580
    %584 = vmatprep.subr.bf16.mxu0 0
    %585 = vmatpush1.bf16.msra.mxu0 %v120
    %586 = vmatprep.subr.bf16.mxu0 0
    %587 = vmatpush1.bf16.msra.mxu0 %v121
    %588 = vmatprep.subr.bf16.mxu0 0
    %589 = vmatpush1.bf16.msra.mxu0 %v122
    %590 = vmatprep.subr.bf16.mxu0 0
    %591 = vmatpush1.bf16.msra.mxu0 %v123
    %592 = vmatprep.subr.bf16.mxu0 0
    %593 = vmatpush1.bf16.msra.mxu0 %v124
    %594 = vmatprep.subr.bf16.mxu0 0
    %595 = vmatpush1.bf16.msra.mxu0 %v125
    %596 = vmatprep.subr.bf16.mxu0 0
    %597 = vmatpush1.bf16.msra.mxu0 %v126
    %598 = vmatprep.subr.bf16.mxu0 0
    %599 = vmatpush1.bf16.msra.mxu0 %v127
    %600 = vmatprep.subr.bf16.mxu0 0
    %601 = vmatpush1.bf16.msra.mxu0 0
    %602 = vmatprep.subr.bf16.mxu0 0
    %603 = vmatpush1.bf16.msra.mxu0 0
    %604 = vmatprep.subr.bf16.mxu0 0
    %605 = vmatpush1.bf16.msra.mxu0 0
    %606 = vmatprep.subr.bf16.mxu0 0
    %607 = vmatpush1.bf16.msra.mxu0 0
    %608 = vmatprep.subr.bf16.mxu0 0
    %609 = vmatpush1.bf16.msra.mxu0 0
    %610 = vmatprep.subr.bf16.mxu0 0
    %611 = vmatpush1.bf16.msra.mxu0 0
    %612 = vmatprep.subr.bf16.mxu0 0
    %613 = vmatpush1.bf16.msra.mxu0 0
    %614 = vmatprep.subr.bf16.mxu0 0
    %615 = vmatpush1.bf16.msra.mxu0 0
    %616 = vmatprep.mubr.bf16.mxu0 0
    %617 = vmatmul.mubr.bf16.gmra.mrb[0].mxu0 %v583
    %v618 = vpop.f32.mrb[0].mxu0
    %v619 = vadd.f32 0.0, %v618
    %v620 = vpop.f32.mrb[0].mxu0
    %v621 = vpop.f32.mrb[0].mxu0
    %v622 = vpop.f32.mrb[0].mxu0
    %623 = vdwg.mxu0
    %v624 = vadd.f32 %v582, %v619
    %v625 = vmul.f32 %v624, 2.0
    %v626 = vsel %vm85, %v625, %v624
    %v627 = vxor.u32 %v626, 2147483648
    %v628 = vmul.f32 %v627, 1.442695
    %v629 = vpow.pop %v628
    %v630 = vadd.f32 %v629, 1.0
    %v631 = vrcp.pop %v630
    %v632 = vmul.f32 1.0, %v631
    %v633 = vmul.f32 %v632, 2.0
    %v634 = vsub.f32 %v633, 1.0
    %v635 = vsel %vm85, %v634, %v632
    %636 = vrot.lane.b32.xlu0 %v635, 64
    %v637 = vpop.permute.xlu0 %636
    %v638 = vmul.f32 %v635, %v637
    %v639 = vmul.f32 %v637, %v578
    %640 = vrot.lane.b32.xlu0 %v638, 32
    %v641 = vpop.permute.xlu0 %640
    %v642 = vadd.f32 %v639, %v641
    %v643 = vtanh.pop %v642
    %v644 = vmul.f32 %v635, %v643
    %v645 = vld [vmem:[%s4] sm:$0x1]
    %v647 = vlaneseq
    %v648 = vshrl.u32 %v647, 7
    %v649 = vsub.s32 0, %v648
    %v650 = vrot.slane %v645, %v649
    %v652 = vmul.f32 %v644, %v650
    %653 = vadd.xlane.f32.xlu0 %v652
    %v654 = vpop.xlane.xlu0 %653
    %s655 = sld [smem:[#allocation2]]
    %v656 = vstv %s655
    %v657 = vadd.f32 %v654, %v656
    %v658 = vxor.u32 %v657, 2147483648
    %v659 = vmul.f32 %v658, 1.442695
    %v660 = vpow.pop %v659
    %v661 = vadd.f32 %v660, 1.0
    %v662 = vrcp.pop %v661
    %v663 = vmul.f32 1.0, %v662
    %664 = vst [vmem:[#allocation9] sm:$0xff] %v663
    // Predicated region
    $region38: #{tpu_custom_call.1} parent=1 // pred_check
      _
    $region39: #{tpu_custom_call.1} parent=1 // pred_check_branch
      %666 = sbr.rel (0) target = $region41
    $region40: #{tpu_custom_call.1} parent=1 // pred_region
      %s668 = ssub.s32 128, 128
      %669 = vsyncadd [#allocation5], %s668
      %s671 = sshll.u32 [#allocation9], 4
      %s672 = int_to_ptr.vmem [resolvable:$true] %s671
      %674 = dma.vmem_to_hbm [thread:$0]  %s672, 128, %s6, [#allocation5]
    $region41: #{tpu_custom_call.1} parent=1 // pred_fallthru
      _
    // Predicated region
    $region42: #{tpu_custom_call.1} parent=1 // pred_check
      _
    $region43: #{tpu_custom_call.1} parent=1 // pred_check_branch
      %676 = sbr.rel (0) target = $region45
    $region44: #{tpu_custom_call.1} parent=1 // pred_region
      %677 = dma.done [#allocation5], 128
    $region45: #{tpu_custom_call.1} parent=1 // pred_fallthru
      _
    %678 = vsyncpa [#allocation4], 1
    %679 = vsyncpa [#allocation7], 1
    %680 = vsyncpa [#allocation5], 1

</llo_original>
